<compile_context>
chip_gen: v7x
topology: tpu7x:2x2x1
jax: 0.10.0
libtpu: 0.0.40
codegen_flags: <defaults>
</compile_context>

<pallas_src>
import functools

import jax
import jax.numpy as jnp
from jax.experimental import pallas as pl
from jax.experimental.pallas import tpu as pltpu


def _mob_decoder_kernel(emb_ref, w_ref, b_ref, od_ref, loss_ref,
                        o_scr, d_scr, s_acc, od_acc, *, n, d, tm):
    i = pl.program_id(0)

    @pl.when(i == 0)
    def _init():
        # Fused projection: emb (n, d) contracted against packed PyTorch-layout
        # weight (2d, d) on its `in` axis -> (n, 2d). No transpose materialized.
        proj = jax.lax.dot_general(
            emb_ref[...], w_ref[...],
            dimension_numbers=(((1,), (1,)), ((), ())),
            preferred_element_type=jnp.float32) + b_ref[...]
        o_scr[...] = proj[:, :d]       # o_emb, persists across grid steps
        d_scr[...] = proj[:, d:]       # d_emb, persists across grid steps
        s_acc[...] = jnp.zeros_like(s_acc)
        od_acc[...] = jnp.zeros_like(od_acc)

    # Row tile of o_emb for this grid step.
    row0 = pl.multiple_of(i * tm, tm)
    o_tile = o_scr[pl.ds(row0, tm), :]                         # (tm, d)

    # inner = o_emb_tile @ d_emb^T (contraction on the embedding axis).
    inner = jax.lax.dot_general(
        o_tile, d_scr[...],
        dimension_numbers=(((1,), (1,)), ((), ())),
        preferred_element_type=jnp.float32)                    # (tm, n)

    # Streamed log-softmax row statistics (no (n, n) log_ps temporary).
    row_max = jnp.max(inner, axis=-1, keepdims=True)           # (tm, 1)
    lse = jnp.log(jnp.sum(jnp.exp(inner - row_max), axis=-1, keepdims=True))

    od = od_ref[...]                                           # (tm, n)
    od_rowsum = jnp.sum(od, axis=-1, keepdims=True)            # (tm, 1)

    # sum(-od * log_softmax(inner)) over this tile:
    #   = sum_r rowsum(od)_r * (row_max_r + lse_r) - sum(od * inner)
    part = jnp.sum(od_rowsum * (row_max + lse)) - jnp.sum(od * inner)
    s_acc[...] += part.reshape(1, 1)
    od_acc[...] += jnp.sum(od_rowsum).reshape(1, 1)

    @pl.when(i == pl.num_programs(0) - 1)
    def _fin():
        # mob = od / mean(od) = od * (n*n) / sum(od)
        # loss = (n*n / sum(od)) * sum(-od * log_softmax(inner))
        loss_ref[...] = s_acc[...] * (float(n * n) / od_acc[...])


def mob_decoder_loss(embeddings, o_w, o_b, d_w, d_b, od_matrix, *, tile_rows=256):
    """embeddings: (n, d); o_w/d_w: (d, d) PyTorch-style (out, in); o_b/d_b: (d,);
    od_matrix: (n, n). Returns scalar loss (f32)."""
    n, d = embeddings.shape

    # Pack both nn.Linear layers into one weight/bias, keeping the PyTorch
    # (out_features, in_features) layout (no transpose is ever materialized).
    w_od = jnp.concatenate([o_w, d_w], axis=0).astype(jnp.float32)          # (2d, d)
    b_od = jnp.concatenate([o_b, d_b], axis=0).reshape(1, 2 * d).astype(jnp.float32)

    # Row-tile size: multiple of 8, dividing n. At the demo size this is n
    # (single grid step, full blocks).
    tm = min(n, tile_rows)
    if n % tm != 0:
        tm = n  # TODO(synk): mask the ragged final row tile instead of falling back

    grid = (n // tm,)
    kernel = functools.partial(_mob_decoder_kernel, n=n, d=d, tm=tm)

    out = pl.pallas_call(
        kernel,
        out_shape=jax.ShapeDtypeStruct((1, 1), jnp.float32),
        grid_spec=pltpu.PrefetchScalarGridSpec(
            num_scalar_prefetch=0,
            grid=grid,
            in_specs=[
                pl.BlockSpec((n, d), lambda i: (0, 0)),        # embeddings (resident)
                pl.BlockSpec((2 * d, d), lambda i: (0, 0)),    # packed weight (resident)
                pl.BlockSpec((1, 2 * d), lambda i: (0, 0)),    # packed bias (resident)
                pl.BlockSpec((tm, n), lambda i: (i, 0)),       # od row tiles (streamed)
            ],
            out_specs=pl.BlockSpec((1, 1), lambda i: (0, 0)),
            scratch_shapes=[
                pltpu.VMEM((n, d), jnp.float32),   # o_emb
                pltpu.VMEM((n, d), jnp.float32),   # d_emb
                pltpu.VMEM((1, 1), jnp.float32),   # accum: sum(-od * log_ps)
                pltpu.VMEM((1, 1), jnp.float32),   # accum: sum(od)
            ],
        ),
        compiler_params=pltpu.CompilerParams(
            dimension_semantics=("arbitrary",),    # accumulator across row tiles
        ),
    )(
        embeddings.astype(jnp.float32),
        w_od,
        b_od,
        od_matrix.astype(jnp.float32),
    )
    return out[0, 0]


def _reference(embeddings, o_w, o_b, d_w, d_b, od_matrix):
    mob = od_matrix / jnp.mean(od_matrix)
    o_emb = embeddings @ o_w.T + o_b
    d_emb = embeddings @ d_w.T + d_b
    inner = o_emb @ d_emb.T
    log_ps = jax.nn.log_softmax(inner, axis=-1)
    return jnp.sum(-mob * log_ps)


if __name__ == "__main__":
    n_nodes = 8          # number of nodes
    embedding_dim = 32   # embedding dimension

    key = jax.random.PRNGKey(0)
    k_emb, k_ow, k_ob, k_dw, k_db, k_od = jax.random.split(key, 6)

    embeddings = jax.random.normal(k_emb, (n_nodes, embedding_dim), jnp.float32)
    # nn.Linear-style params: weight (out_features, in_features), bias (out_features,)
    bound = 1.0 / jnp.sqrt(embedding_dim)
    o_w = jax.random.uniform(k_ow, (embedding_dim, embedding_dim), jnp.float32, -bound, bound)
    o_b = jax.random.uniform(k_ob, (embedding_dim,), jnp.float32, -bound, bound)
    d_w = jax.random.uniform(k_dw, (embedding_dim, embedding_dim), jnp.float32, -bound, bound)
    d_b = jax.random.uniform(k_db, (embedding_dim,), jnp.float32, -bound, bound)
    # OD matrix: non-negative counts
    od_matrix = jax.random.uniform(k_od, (n_nodes, n_nodes), jnp.float32, 0.0, 10.0)

    loss = mob_decoder_loss(embeddings, o_w, o_b, d_w, d_b, od_matrix)
    jax.block_until_ready(loss)

    ref = _reference(embeddings, o_w, o_b, d_w, d_b, od_matrix)
    assert jnp.allclose(loss, ref, rtol=1e-4, atol=1e-4), (loss, ref)

    print("KERNEL_OK")
</pallas_src>

<mosaic_0001>
module attributes {stable_mosaic.version = 11 : i64} {
  func.func @_mob_decoder_kernel(%arg0: i32, %arg1: memref<8x32xf32, #tpu.memory_space<vmem>>, %arg2: memref<64x32xf32, #tpu.memory_space<vmem>>, %arg3: memref<1x64xf32, #tpu.memory_space<vmem>>, %arg4: memref<8x8xf32, #tpu.memory_space<vmem>>, %arg5: memref<1x1xf32, #tpu.memory_space<vmem>>, %arg6: memref<8x32xf32, #tpu.memory_space<vmem>>, %arg7: memref<8x32xf32, #tpu.memory_space<vmem>>, %arg8: memref<1x1xf32, #tpu.memory_space<vmem>>, %arg9: memref<1x1xf32, #tpu.memory_space<vmem>>) attributes {dimension_semantics = [#tpu.dimension_semantics<arbitrary>], iteration_bounds = array<i64: 1>, scalar_prefetch = 0 : i64, scratch_operands = 4 : i64, tpu.core_type = #tpu.core_type<tc>, window_params = [{pipeline_mode = #tpu.pipeline_mode<synchronous>, transform_indices = @transform_0, window_bounds = array<i64: 8, 32>}, {pipeline_mode = #tpu.pipeline_mode<synchronous>, transform_indices = @transform_1, window_bounds = array<i64: 64, 32>}, {pipeline_mode = #tpu.pipeline_mode<synchronous>, transform_indices = @transform_2, window_bounds = array<i64: 1, 64>}, {transform_indices = @transform_3, window_bounds = array<i64: 8, 8>}, {pipeline_mode = #tpu.pipeline_mode<synchronous>, transform_indices = @transform_4, window_bounds = array<i64: 1, 1>}]} {
    %c0_i32 = arith.constant 0 : i32
    %0 = arith.cmpi eq, %arg0, %c0_i32 : i32
    %1 = arith.extui %0 : i1 to i32
    %c0_i32_0 = arith.constant 0 : i32
    %2 = arith.cmpi ne, %1, %c0_i32_0 : i32
    scf.if %2 {
      %c0_21 = arith.constant 0 : index
      %c0_22 = arith.constant 0 : index
      %47 = vector.load %arg1[%c0_21, %c0_22] : memref<8x32xf32, #tpu.memory_space<vmem>>, vector<8x32xf32>
      %c0_23 = arith.constant 0 : index
      %c0_24 = arith.constant 0 : index
      %48 = vector.load %arg2[%c0_23, %c0_24] : memref<64x32xf32, #tpu.memory_space<vmem>>, vector<64x32xf32>
      %cst_25 = arith.constant dense<0.000000e+00> : vector<8x64xf32>
      %49 = tpu.matmul %47, %48, %cst_25 {dimension_numbers = #tpu.dot_dimension_numbers<[1], [1], [0], [0], [0, 0, 1, 0], [], []>} : vector<8x32xf32>, vector<64x32xf32>, vector<8x64xf32> -> vector<8x64xf32>
      %c0_26 = arith.constant 0 : index
      %c0_27 = arith.constant 0 : index
      %50 = vector.load %arg3[%c0_26, %c0_27] : memref<1x64xf32, #tpu.memory_space<vmem>>, vector<1x64xf32>
      %51 = vector.broadcast %50 : vector<1x64xf32> to vector<8x64xf32>
      %52 = arith.addf %49, %51 : vector<8x64xf32>
      %53 = vector.extract_strided_slice %52 {offsets = [0, 0], sizes = [8, 32], strides = [1, 1]} : vector<8x64xf32> to vector<8x32xf32>
      %c0_28 = arith.constant 0 : index
      %c0_29 = arith.constant 0 : index
      %54 = vector.load %arg6[%c0_28, %c0_29] : memref<8x32xf32, #tpu.memory_space<vmem>>, vector<8x32xf32>
      tpu.vector_store %arg6[%c0_28, %c0_29], %53 {strides = array<i32>} : memref<8x32xf32, #tpu.memory_space<vmem>>, vector<8x32xf32>,
      %55 = vector.extract_strided_slice %52 {offsets = [0, 32], sizes = [8, 32], strides = [1, 1]} : vector<8x64xf32> to vector<8x32xf32>
      %c0_30 = arith.constant 0 : index
      %c0_31 = arith.constant 0 : index
      %56 = vector.load %arg7[%c0_30, %c0_31] : memref<8x32xf32, #tpu.memory_space<vmem>>, vector<8x32xf32>
      tpu.vector_store %arg7[%c0_30, %c0_31], %55 {strides = array<i32>} : memref<8x32xf32, #tpu.memory_space<vmem>>, vector<8x32xf32>,
      %cst_32 = arith.constant 0.000000e+00 : f32
      %57 = vector.broadcast %cst_32 : f32 to vector<1x1xf32>
      %c0_33 = arith.constant 0 : index
      %c0_34 = arith.constant 0 : index
      %58 = vector.load %arg8[%c0_33, %c0_34] : memref<1x1xf32, #tpu.memory_space<vmem>>, vector<1x1xf32>
      tpu.vector_store %arg8[%c0_33, %c0_34], %57 {strides = array<i32>} : memref<1x1xf32, #tpu.memory_space<vmem>>, vector<1x1xf32>,
      %cst_35 = arith.constant 0.000000e+00 : f32
      %59 = vector.broadcast %cst_35 : f32 to vector<1x1xf32>
      %c0_36 = arith.constant 0 : index
      %c0_37 = arith.constant 0 : index
      %60 = vector.load %arg9[%c0_36, %c0_37] : memref<1x1xf32, #tpu.memory_space<vmem>>, vector<1x1xf32>
      tpu.vector_store %arg9[%c0_36, %c0_37], %59 {strides = array<i32>} : memref<1x1xf32, #tpu.memory_space<vmem>>, vector<1x1xf32>,
    } else {
    }
    %c8_i32 = arith.constant 8 : i32
    %3 = arith.muli %arg0, %c8_i32 : i32
    %4 = tpu.assume_multiple %3, 8 : i32
    %5 = arith.index_cast %4 : i32 to index
    %c0 = arith.constant 0 : index
    %6 = vector.load %arg6[%5, %c0] : memref<8x32xf32, #tpu.memory_space<vmem>>, vector<8x32xf32>
    %c0_1 = arith.constant 0 : index
    %c0_2 = arith.constant 0 : index
    %7 = vector.load %arg7[%c0_1, %c0_2] : memref<8x32xf32, #tpu.memory_space<vmem>>, vector<8x32xf32>
    %cst = arith.constant dense<0.000000e+00> : vector<8x8xf32>
    %8 = tpu.matmul %6, %7, %cst {dimension_numbers = #tpu.dot_dimension_numbers<[1], [1], [0], [0], [0, 0, 1, 0], [], []>} : vector<8x32xf32>, vector<8x32xf32>, vector<8x8xf32> -> vector<8x8xf32>
    %cst_3 = arith.constant dense<0xFF800000> : vector<8xf32>
    %9 = vector.multi_reduction <maximumf>, %8, %cst_3 [1] : vector<8x8xf32> to vector<8xf32>
    %10 = vector.shape_cast %9 : vector<8xf32> to vector<8x1xf32>
    %11 = vector.broadcast %10 : vector<8x1xf32> to vector<8x8xf32>
    %12 = arith.subf %8, %11 : vector<8x8xf32>
    %13 = math.exp %12 : vector<8x8xf32>
    %cst_4 = arith.constant dense<0.000000e+00> : vector<8xf32>
    %14 = vector.multi_reduction <add>, %13, %cst_4 [1] : vector<8x8xf32> to vector<8xf32>
    %15 = vector.shape_cast %14 : vector<8xf32> to vector<8x1xf32>
    %16 = math.log %15 : vector<8x1xf32>
    %c0_5 = arith.constant 0 : index
    %c0_6 = arith.constant 0 : index
    %17 = vector.load %arg4[%c0_5, %c0_6] : memref<8x8xf32, #tpu.memory_space<vmem>>, vector<8x8xf32>
    %cst_7 = arith.constant dense<0.000000e+00> : vector<8xf32>
    %18 = vector.multi_reduction <add>, %17, %cst_7 [1] : vector<8x8xf32> to vector<8xf32>
    %19 = vector.shape_cast %18 : vector<8xf32> to vector<8x1xf32>
    %20 = arith.addf %10, %16 : vector<8x1xf32>
    %21 = arith.mulf %19, %20 : vector<8x1xf32>
    %22 = vector.shape_cast %21 : vector<8x1xf32> to vector<1x8x1xf32>
    %cst_8 = arith.constant dense<0.000000e+00> : vector<1xf32>
    %23 = vector.multi_reduction <add>, %22, %cst_8 [1, 2] : vector<1x8x1xf32> to vector<1xf32>
    %24 = vector.shape_cast %23 : vector<1xf32> to vector<1x1x1xf32>
    %25 = vector.extract %24[0, 0, 0] : f32 from vector<1x1x1xf32>
    %26 = arith.mulf %17, %8 : vector<8x8xf32>
    %27 = vector.shape_cast %26 : vector<8x8xf32> to vector<1x8x8xf32>
    %cst_9 = arith.constant dense<0.000000e+00> : vector<1xf32>
    %28 = vector.multi_reduction <add>, %27, %cst_9 [1, 2] : vector<1x8x8xf32> to vector<1xf32>
    %29 = vector.shape_cast %28 : vector<1xf32> to vector<1x1x1xf32>
    %30 = vector.extract %29[0, 0, 0] : f32 from vector<1x1x1xf32>
    %31 = arith.subf %25, %30 : f32
    %c0_10 = arith.constant 0 : index
    %c0_11 = arith.constant 0 : index
    %32 = vector.load %arg8[%c0_10, %c0_11] : memref<1x1xf32, #tpu.memory_space<vmem>>, vector<1x1xf32>
    %33 = vector.broadcast %31 : f32 to vector<1x1xf32>
    %34 = arith.addf %32, %33 : vector<1x1xf32>
    %c0_12 = arith.constant 0 : index
    %c0_13 = arith.constant 0 : index
    %35 = vector.load %arg8[%c0_12, %c0_13] : memref<1x1xf32, #tpu.memory_space<vmem>>, vector<1x1xf32>
    tpu.vector_store %arg8[%c0_12, %c0_13], %34 {strides = array<i32>} : memref<1x1xf32, #tpu.memory_space<vmem>>, vector<1x1xf32>,
    %c0_14 = arith.constant 0 : index
    %c0_15 = arith.constant 0 : index
    %36 = vector.load %arg9[%c0_14, %c0_15] : memref<1x1xf32, #tpu.memory_space<vmem>>, vector<1x1xf32>
    %37 = vector.shape_cast %19 : vector<8x1xf32> to vector<1x8x1xf32>
    %cst_16 = arith.constant dense<0.000000e+00> : vector<1xf32>
    %38 = vector.multi_reduction <add>, %37, %cst_16 [1, 2] : vector<1x8x1xf32> to vector<1xf32>
    %39 = vector.shape_cast %38 : vector<1xf32> to vector<1x1x1xf32>
    %40 = vector.extract %39[0, 0, 0] : f32 from vector<1x1x1xf32>
    %41 = vector.broadcast %40 : f32 to vector<1x1xf32>
    %42 = arith.addf %36, %41 : vector<1x1xf32>
    %c0_17 = arith.constant 0 : index
    %c0_18 = arith.constant 0 : index
    %43 = vector.load %arg9[%c0_17, %c0_18] : memref<1x1xf32, #tpu.memory_space<vmem>>, vector<1x1xf32>
    tpu.vector_store %arg9[%c0_17, %c0_18], %42 {strides = array<i32>} : memref<1x1xf32, #tpu.memory_space<vmem>>, vector<1x1xf32>,
    %c0_i32_19 = arith.constant 0 : i32
    %44 = arith.cmpi eq, %arg0, %c0_i32_19 : i32
    %45 = arith.extui %44 : i1 to i32
    %c0_i32_20 = arith.constant 0 : i32
    %46 = arith.cmpi ne, %45, %c0_i32_20 : i32
    scf.if %46 {
      %c0_21 = arith.constant 0 : index
      %c0_22 = arith.constant 0 : index
      %47 = vector.load %arg8[%c0_21, %c0_22] : memref<1x1xf32, #tpu.memory_space<vmem>>, vector<1x1xf32>
      %c0_23 = arith.constant 0 : index
      %c0_24 = arith.constant 0 : index
      %48 = vector.load %arg9[%c0_23, %c0_24] : memref<1x1xf32, #tpu.memory_space<vmem>>, vector<1x1xf32>
      %cst_25 = arith.constant 6.400000e+01 : f32
      %49 = vector.broadcast %cst_25 : f32 to vector<1x1xf32>
      %50 = arith.divf %49, %48 : vector<1x1xf32>
      %51 = arith.mulf %47, %50 : vector<1x1xf32>
      %c0_26 = arith.constant 0 : index
      %c0_27 = arith.constant 0 : index
      %52 = vector.load %arg5[%c0_26, %c0_27] : memref<1x1xf32, #tpu.memory_space<vmem>>, vector<1x1xf32>
      tpu.vector_store %arg5[%c0_26, %c0_27], %51 {strides = array<i32>} : memref<1x1xf32, #tpu.memory_space<vmem>>, vector<1x1xf32>,
    } else {
    }
    return
  }
  func.func @transform_0(%arg0: i32) -> (i32, i32) {
    %c0_i32 = arith.constant 0 : i32
    %c0_i32_0 = arith.constant 0 : i32
    %c0_i32_1 = arith.constant 0 : i32
    return %c0_i32, %c0_i32_0 : i32, i32
  }
  func.func @transform_1(%arg0: i32) -> (i32, i32) {
    %c0_i32 = arith.constant 0 : i32
    %c0_i32_0 = arith.constant 0 : i32
    %c0_i32_1 = arith.constant 0 : i32
    return %c0_i32, %c0_i32_0 : i32, i32
  }
  func.func @transform_2(%arg0: i32) -> (i32, i32) {
    %c0_i32 = arith.constant 0 : i32
    %c0_i32_0 = arith.constant 0 : i32
    %c0_i32_1 = arith.constant 0 : i32
    return %c0_i32, %c0_i32_0 : i32, i32
  }
  func.func @transform_3(%arg0: i32) -> (i32, i32) {
    %c0_i32 = arith.constant 0 : i32
    %c0_i32_0 = arith.constant 0 : i32
    return %arg0, %c0_i32 : i32, i32
  }
  func.func @transform_4(%arg0: i32) -> (i32, i32) {
    %c0_i32 = arith.constant 0 : i32
    %c0_i32_0 = arith.constant 0 : i32
    %c0_i32_1 = arith.constant 0 : i32
    return %c0_i32, %c0_i32_0 : i32, i32
  }
}

</mosaic_0001>

<llo_original>
// kernel: tpu_custom_call.1
$region0: #{tpu_custom_call.1}
  #allocation0 [shape = 'u32[]', space=smem, size = 0x4, offset = 0x4, fixed_abs, tag = 'smem constant byte address 0x4 - core index']
  #allocation1 [shape = 'u32[144,128]{1,0:T(1,128)}', space=vmem, size = 0x12000, scoped, tag = 'internal scratch']
  #allocation2 [shape = 'f32[8,32]{1,0:T(8,128)}', space=vmem, size = 0x1000, scoped, tag = 'scratch operand']
  #allocation3 [shape = 'f32[8,32]{1,0:T(8,128)}', space=vmem, size = 0x1000, scoped, tag = 'scratch operand']
  #allocation4 [shape = 'f32[1,1]{1,0:T(1,128)}', space=vmem, size = 0x200, scoped, tag = 'scratch operand']
  #allocation5 [shape = 'f32[1,1]{1,0:T(1,128)}', space=vmem, size = 0x200, scoped, tag = 'scratch operand']
  %s0 = inlined_call_operand.vmem [shape: f32[8,32], index: 0, kind: input, shape index: {}]
  %s1 = inlined_call_operand.vmem [shape: f32[64,32], index: 1, kind: input, shape index: {}]
  %s2 = inlined_call_operand.vmem [shape: f32[1,64], index: 2, kind: input, shape index: {}]
  %s3 = inlined_call_operand.vmem [shape: f32[8,8], index: 3, kind: input, shape index: {}]
  %s4 = inlined_call_operand.hbm [shape: f32[1,1], index: 4, kind: output, shape index: {}]
  %s5 = sld [smem:[#allocation0]]
  $region34: #{tpu_custom_call.1} parent=0
    _
  %s7 = ssub.s32 1, %s5
  %s8 = scalar_select 0, %s7, %s5
  $region1: #{tpu_custom_call.1} parent=0
    #allocation6 [shape = 'u8[512]{0}', space=vmem, size = 0x400, scoped, tag = 'output window, operand 0, single buffered']
    #allocation7 [shape = 's32[1]{0}', space=sflag, size = 0x4, scoped, tag = 'scoped memory for tpu_custom_call.1']
    %9 = vsyncpa [#allocation7], 0
    // Predicated region
    $region2: #{tpu_custom_call.1} parent=1 // pred_check
      _
    $region3: #{tpu_custom_call.1} parent=1 // pred_check_branch
      %11 = sbr.rel (0) target = $region5
    $region4: #{tpu_custom_call.1} parent=1 // pred_region
      _
    $region5: #{tpu_custom_call.1} parent=1 // pred_fallthru
      _
    // Predicated region
    $region6: #{tpu_custom_call.1} parent=1 // pred_check
      _
    $region7: #{tpu_custom_call.1} parent=1 // pred_check_branch
      %13 = sbr.rel (0) target = $region9
    $region8: #{tpu_custom_call.1} parent=1 // pred_region
      _
    $region9: #{tpu_custom_call.1} parent=1 // pred_fallthru
      _
    // Predicated region
    $region10: #{tpu_custom_call.1} parent=1 // pred_check
      _
    $region11: #{tpu_custom_call.1} parent=1 // pred_check_branch
      %15 = sbr.rel (0) target = $region13
    $region12: #{tpu_custom_call.1} parent=1 // pred_region
      _
    $region13: #{tpu_custom_call.1} parent=1 // pred_fallthru
      _
    // Predicated region
    $region14: #{tpu_custom_call.1} parent=1 // pred_check
      _
    $region15: #{tpu_custom_call.1} parent=1 // pred_check_branch
      %17 = sbr.rel (0) target = $region17
    $region16: #{tpu_custom_call.1} parent=1 // pred_region
      _
    $region17: #{tpu_custom_call.1} parent=1 // pred_fallthru
      _
    %p18 = scmp.eq.s32.totalorder 0, 0
    // Predicated region
    $region18: #{tpu_custom_call.1} parent=1 // pred_check
      %p19 = pneg %p18
    $region19: #{tpu_custom_call.1} parent=1 // pred_check_branch
      %21 = sbr.rel (%p19) target = $region21
    $region20: #{tpu_custom_call.1} parent=1 // pred_region
      %v22 = vld [vmem:[%s0] sm:$0xff]
      %v23 = vld [vmem:[%s1] sm:$0xff]
      %v24 = vld [vmem:[%s1 + $0x8] sm:$0xff]
      %v25 = vld [vmem:[%s1 + $0x10] sm:$0xff]
      %v26 = vld [vmem:[%s1 + $0x18] sm:$0xff]
      %v27 = vld [vmem:[%s1 + $0x20] sm:$0xff]
      %v28 = vld [vmem:[%s1 + $0x28] sm:$0xff]
      %v29 = vld [vmem:[%s1 + $0x30] sm:$0xff]
      %v30 = vld [vmem:[%s1 + $0x38] sm:$0xff]
      %v31 = vld [vmem:[%s2] sm:$0x1]
      %v33 = vlaneseq
      %v34 = vshrl.u32 %v33, 7
      %v35 = vsub.s32 0, %v34
      %v36 = vrot.slane %v31, %v35
      %vm38 = vcmask 261120
      %v40 = vsel %vm38, %v22, 0
      %v43 = vsel %vm38, %v23, 0
      %v46 = vsel %vm38, %v24, 0
      %v49 = vsel %vm38, %v25, 0
      %v52 = vsel %vm38, %v26, 0
      %v55 = vsel %vm38, %v27, 0
      %v58 = vsel %vm38, %v28, 0
      %v61 = vsel %vm38, %v29, 0
      %v64 = vsel %vm38, %v30, 0
      %66 = vmatprep.subr.mxu0 0.0
      %67 = vmatpush1.xpose.msra.mxu0 %v43
      %68 = vmatprep.subr.mxu0 0.0
      %69 = vmatpush1.xpose.msra.mxu0 %v46
      %70 = vmatprep.subr.mxu0 0.0
      %71 = vmatpush1.xpose.msra.mxu0 %v49
      %72 = vmatprep.subr.mxu0 0.0
      %73 = vmatpush1.xpose.msra.mxu0 %v52
      %74 = vmatprep.subr.mxu0 0.0
      %75 = vmatpush1.xpose.msra.mxu0 %v55
      %76 = vmatprep.subr.mxu0 0.0
      %77 = vmatpush1.xpose.msra.mxu0 %v58
      %78 = vmatprep.subr.mxu0 0.0
      %79 = vmatpush1.xpose.msra.mxu0 %v61
      %80 = vmatprep.subr.mxu0 0.0
      %81 = vmatpush1.xpose.msra.mxu0 %v64
      %82 = vmatprep.subr.mxu0 0.0
      %83 = vmatpush1.xpose.msra.mxu0 0.0
      %84 = vmatprep.subr.mxu0 0.0
      %85 = vmatpush1.xpose.msra.mxu0 0.0
      %86 = vmatprep.subr.mxu0 0.0
      %87 = vmatpush1.xpose.msra.mxu0 0.0
      %88 = vmatprep.subr.mxu0 0.0
      %89 = vmatpush1.xpose.msra.mxu0 0.0
      %90 = vmatprep.subr.mxu0 0.0
      %91 = vmatpush1.xpose.msra.mxu0 0.0
      %92 = vmatprep.subr.mxu0 0.0
      %93 = vmatpush1.xpose.msra.mxu0 0.0
      %94 = vmatprep.subr.mxu0 0.0
      %95 = vmatpush1.xpose.msra.mxu0 0.0
      %96 = vmatprep.subr.mxu0 0.0
      %97 = vmatpush1.xpose.msra.mxu0 0.0
      %98 = vmatprep.subr.mxu0 0.0
      %99 = vmatpush1.xpose.msra.mxu0 0.0
      %100 = vmatprep.subr.mxu0 0.0
      %101 = vmatpush1.xpose.msra.mxu0 0.0
      %102 = vmatprep.subr.mxu0 0.0
      %103 = vmatpush1.xpose.msra.mxu0 0.0
      %104 = vmatprep.subr.mxu0 0.0
      %105 = vmatpush1.xpose.msra.mxu0 0.0
      %106 = vmatprep.subr.mxu0 0.0
      %107 = vmatpush1.xpose.msra.mxu0 0.0
      %108 = vmatprep.subr.mxu0 0.0
      %109 = vmatpush1.xpose.msra.mxu0 0.0
      %110 = vmatprep.subr.mxu0 0.0
      %111 = vmatpush1.xpose.msra.mxu0 0.0
      %112 = vmatprep.subr.mxu0 0.0
      %113 = vmatpush1.xpose.msra.mxu0 0.0
      %114 = vmatprep.subr.mxu0 0.0
      %115 = vmatpush1.xpose.msra.mxu0 0.0
      %116 = vmatprep.subr.mxu0 0.0
      %117 = vmatpush1.xpose.msra.mxu0 0.0
      %118 = vmatprep.subr.mxu0 0.0
      %119 = vmatpush1.xpose.msra.mxu0 0.0
      %120 = vmatprep.subr.mxu0 0.0
      %121 = vmatpush1.xpose.msra.mxu0 0.0
      %122 = vmatprep.subr.mxu0 0.0
      %123 = vmatpush1.xpose.msra.mxu0 0.0
      %124 = vmatprep.subr.mxu0 0.0
      %125 = vmatpush1.xpose.msra.mxu0 0.0
      %126 = vmatprep.subr.mxu0 0.0
      %127 = vmatpush1.xpose.msra.mxu0 0.0
      %128 = vmatprep.subr.mxu0 0.0
      %129 = vmatpush1.xpose.msra.mxu0 0.0
      %130 = vmatprep.mubr.f32.mxu0 0.0
      %131 = vmatmul.mubr.f32.gmra.mrb[0].mxu0 %v40
      %v132 = vpop.f32.mrb[0].mxu0
      %v133 = vadd.f32 %v36, %v132
      %v134 = vpop.f32.mrb[0].mxu0
      %135 = vdwg.mxu0
      %136 = vst.msk [vmem:[#allocation2] sm:$0xff] %vm38, %v133
      %138 = vrot.lane.b32.xlu0 %v133, 96
      %v139 = vpop.permute.xlu0 %138
      %141 = vst.msk [vmem:[#allocation3] sm:$0xff] %vm38, %v139
      %vm142 = vcmask 0
      %143 = vst.msk [vmem:[#allocation4] sm:$0x1] %vm142, 0.0
      %144 = vst.msk [vmem:[#allocation5] sm:$0x1] %vm142, 0.0
    $region21: #{tpu_custom_call.1} parent=1 // pred_fallthru
      _
    %s145 = smul.u32 0, 8
    %s146 = scalar_lea.vmem [#allocation2], %s145
    %v147 = vld [vmem:[%s146] sm:$0xff]
    %v148 = vld [vmem:[#allocation3] sm:$0xff]
    %vm149 = vcmask 261120
    %v151 = vsel %vm149, %v147, 0
    %v154 = vsel %vm149, %v148, 0
    %156 = vmatprep.subr.mxu0 0.0
    %157 = vmatpush1.xpose.msra.mxu0 %v154
    %158 = vmatprep.subr.mxu0 0.0
    %159 = vmatpush1.xpose.msra.mxu0 0.0
    %160 = vmatprep.subr.mxu0 0.0
    %161 = vmatpush1.xpose.msra.mxu0 0.0
    %162 = vmatprep.subr.mxu0 0.0
    %163 = vmatpush1.xpose.msra.mxu0 0.0
    %164 = vmatprep.subr.mxu0 0.0
    %165 = vmatpush1.xpose.msra.mxu0 0.0
    %166 = vmatprep.subr.mxu0 0.0
    %167 = vmatpush1.xpose.msra.mxu0 0.0
    %168 = vmatprep.subr.mxu0 0.0
    %169 = vmatpush1.xpose.msra.mxu0 0.0
    %170 = vmatprep.subr.mxu0 0.0
    %171 = vmatpush1.xpose.msra.mxu0 0.0
    %172 = vmatprep.subr.mxu0 0.0
    %173 = vmatpush1.xpose.msra.mxu0 0.0
    %174 = vmatprep.subr.mxu0 0.0
    %175 = vmatpush1.xpose.msra.mxu0 0.0
    %176 = vmatprep.subr.mxu0 0.0
    %177 = vmatpush1.xpose.msra.mxu0 0.0
    %178 = vmatprep.subr.mxu0 0.0
    %179 = vmatpush1.xpose.msra.mxu0 0.0
    %180 = vmatprep.subr.mxu0 0.0
    %181 = vmatpush1.xpose.msra.mxu0 0.0
    %182 = vmatprep.subr.mxu0 0.0
    %183 = vmatpush1.xpose.msra.mxu0 0.0
    %184 = vmatprep.subr.mxu0 0.0
    %185 = vmatpush1.xpose.msra.mxu0 0.0
    %186 = vmatprep.subr.mxu0 0.0
    %187 = vmatpush1.xpose.msra.mxu0 0.0
    %188 = vmatprep.subr.mxu0 0.0
    %189 = vmatpush1.xpose.msra.mxu0 0.0
    %190 = vmatprep.subr.mxu0 0.0
    %191 = vmatpush1.xpose.msra.mxu0 0.0
    %192 = vmatprep.subr.mxu0 0.0
    %193 = vmatpush1.xpose.msra.mxu0 0.0
    %194 = vmatprep.subr.mxu0 0.0
    %195 = vmatpush1.xpose.msra.mxu0 0.0
    %196 = vmatprep.subr.mxu0 0.0
    %197 = vmatpush1.xpose.msra.mxu0 0.0
    %198 = vmatprep.subr.mxu0 0.0
    %199 = vmatpush1.xpose.msra.mxu0 0.0
    %200 = vmatprep.subr.mxu0 0.0
    %201 = vmatpush1.xpose.msra.mxu0 0.0
    %202 = vmatprep.subr.mxu0 0.0
    %203 = vmatpush1.xpose.msra.mxu0 0.0
    %204 = vmatprep.subr.mxu0 0.0
    %205 = vmatpush1.xpose.msra.mxu0 0.0
    %206 = vmatprep.subr.mxu0 0.0
    %207 = vmatpush1.xpose.msra.mxu0 0.0
    %208 = vmatprep.subr.mxu0 0.0
    %209 = vmatpush1.xpose.msra.mxu0 0.0
    %210 = vmatprep.subr.mxu0 0.0
    %211 = vmatpush1.xpose.msra.mxu0 0.0
    %212 = vmatprep.subr.mxu0 0.0
    %213 = vmatpush1.xpose.msra.mxu0 0.0
    %214 = vmatprep.subr.mxu0 0.0
    %215 = vmatpush1.xpose.msra.mxu0 0.0
    %216 = vmatprep.subr.mxu0 0.0
    %217 = vmatpush1.xpose.msra.mxu0 0.0
    %218 = vmatprep.subr.mxu0 0.0
    %219 = vmatpush1.xpose.msra.mxu0 0.0
    %220 = vmatprep.mubr.f32.mxu0 0.0
    %221 = vmatmul.mubr.f32.gmra.mrb[0].mxu0 %v151
    %v222 = vpop.f32.mrb[0].mxu0
    %v223 = vadd.f32 0.0, %v222
    %v224 = vpop.f32.mrb[0].mxu0
    %225 = vdwg.mxu0
    %vm226 = vcmask 64512
    %v227 = vsel %vm226, %v223, -inf
    %228 = vmax.xlane.f32.xlu0 %v227
    %v229 = vpop.xlane.xlu0 %228
    %v230 = vsub.f32 %v223, %v229
    %v231 = vmul.f32 %v230, 1.442695
    %v232 = vpow.pop %v231
    %v233 = vsel %vm226, %v232, 0.0
    %234 = vadd.xlane.f32.xlu0 %v233
    %v235 = vpop.xlane.xlu0 %234
    %v236 = vlog2.pop %v235
    %v237 = vmul.f32 %v236, 0.6931472
    %v238 = vld [vmem:[%s3] sm:$0xff]
    %v239 = vsel %vm226, %v238, 0.0
    %240 = vadd.xlane.f32.xlu0 %v239
    %v241 = vpop.xlane.xlu0 %240
    %v242 = vadd.f32 %v229, %v237
    %v243 = vmul.f32 %v241, %v242
    %vm244 = vcmask 7168
    %v245 = vsel %vm244, %v243, 0.0
    %246 = vadd.xlane.f32.xlu0 %v245
    %v247 = vpop.xlane.xlu0 %246
    %v248 = vrot.slane %v247, 4
    %v249 = vadd.f32 %v247, %v248
    %v250 = vrot.slane %v249, 2
    %v251 = vadd.f32 %v249, %v250
    %v252 = vrot.slane %v251, 1
    %v253 = vadd.f32 %v251, %v252
    %s254 = vtos %v253
    %v255 = vmul.f32 %v238, %v223
    %v256 = vsel %vm226, %v255, 0.0
    %257 = vadd.xlane.f32.xlu0 %v256
    %v258 = vpop.xlane.xlu0 %257
    %v259 = vrot.slane %v258, 4
    %v260 = vadd.f32 %v258, %v259
    %v261 = vrot.slane %v260, 2
    %v262 = vadd.f32 %v260, %v261
    %v263 = vrot.slane %v262, 1
    %v264 = vadd.f32 %v262, %v263
    %s265 = vtos %v264
    %s266 = ssub.f32 %s254, %s265
    %v267 = vld [vmem:[#allocation4] sm:$0x1]
    %v268 = vstv %s266
    %v269 = vadd.f32 %v267, %v268
    %vm270 = vcmask 0
    %271 = vst.msk [vmem:[#allocation4] sm:$0x1] %vm270, %v269
    %v272 = vld [vmem:[#allocation5] sm:$0x1]
    %v273 = vsel %vm244, %v241, 0.0
    %274 = vadd.xlane.f32.xlu0 %v273
    %v275 = vpop.xlane.xlu0 %274
    %v276 = vrot.slane %v275, 4
    %v277 = vadd.f32 %v275, %v276
    %v278 = vrot.slane %v277, 2
    %v279 = vadd.f32 %v277, %v278
    %v280 = vrot.slane %v279, 1
    %v281 = vadd.f32 %v279, %v280
    %s282 = vtos %v281
    %v283 = vstv %s282
    %v284 = vadd.f32 %v272, %v283
    %285 = vst.msk [vmem:[#allocation5] sm:$0x1] %vm270, %v284
    // Predicated region
    $region22: #{tpu_custom_call.1} parent=1 // pred_check
      %p286 = pneg %p18
    $region23: #{tpu_custom_call.1} parent=1 // pred_check_branch
      %288 = sbr.rel (%p286) target = $region25
    $region24: #{tpu_custom_call.1} parent=1 // pred_region
      %v289 = vld [vmem:[#allocation4] sm:$0x1]
      %v290 = vld [vmem:[#allocation5] sm:$0x1]
      %v291 = vrcp.pop %v290
      %v292 = vmul.f32 64.0, %v291
      %v293 = vmul.f32 %v289, %v292
      %294 = vst.msk [vmem:[#allocation6] sm:$0x1] %vm270, %v293
    $region25: #{tpu_custom_call.1} parent=1 // pred_fallthru
      _
    // Predicated region
    $region26: #{tpu_custom_call.1} parent=1 // pred_check
      _
    $region27: #{tpu_custom_call.1} parent=1 // pred_check_branch
      %296 = sbr.rel (0) target = $region29
    $region28: #{tpu_custom_call.1} parent=1 // pred_region
      %s298 = ssub.s32 16, 16
      %299 = vsyncadd [#allocation7], %s298
      %s301 = sshll.u32 [#allocation6], 4
      %s302 = int_to_ptr.vmem [resolvable:$true] %s301
      %304 = dma.vmem_to_hbm [thread:$0]  %s302, 16, %s4, [#allocation7]
    $region29: #{tpu_custom_call.1} parent=1 // pred_fallthru
      _
    // Predicated region
    $region30: #{tpu_custom_call.1} parent=1 // pred_check
      _
    $region31: #{tpu_custom_call.1} parent=1 // pred_check_branch
      %306 = sbr.rel (0) target = $region33
    $region32: #{tpu_custom_call.1} parent=1 // pred_region
      %307 = dma.done [#allocation7], 16
    $region33: #{tpu_custom_call.1} parent=1 // pred_fallthru
      _
    %308 = vsyncpa [#allocation7], 1

</llo_original>
